<compile_context>
chip_gen: v7x
topology: tpu7x:2x2x1
jax: 0.10.0
libtpu: 0.0.40
codegen_flags: <defaults>
</compile_context>

<pallas_src>
import functools
import math

import jax
import jax.numpy as jnp
from jax.experimental import pallas as pl
from jax.experimental.pallas import tpu as pltpu


# ----------------------------------------------------------------------------- helpers / chip config
def _round_up(x, m):
    return ((x + m - 1) // m) * m


def _tpu_config():
    """(tm_max, vmem_limit_bytes) — generation dependent, safe fallbacks."""
    vmem_cap = 64 * 1024 * 1024
    tm_max = 128  # v5e MXU is 4x128^2 -> 128-row LHS tiles
    try:
        vmem_cap = getattr(
            pltpu.get_tpu_info(), "vmem_capacity_bytes", 64 * 1024 * 1024
        )
    except Exception:
        pass
    try:
        kind = jax.devices()[0].device_kind.lower()
        if any(t in kind for t in ("v6", "v7", "7x")):
            tm_max = 256  # v6e/v7x MXU is 2x256^2 -> feed 256-row LHS tiles
    except Exception:
        pass
    vmem_limit = min(100 * 1024 * 1024, int(vmem_cap) * 3 // 4)
    return tm_max, vmem_limit


TM_MAX, VMEM_LIMIT_BYTES = _tpu_config()


# ----------------------------------------------------------------------------- tiled GEMM kernel
def _matmul_bias_kernel(x_ref, w_ref, b_ref, o_ref, acc_ref, *, relu):
    """o[i,j] = sum_k x[i,k] @ w[k,j] + b[j] (optional ReLU).

    bf16 MXU operands, f32 VMEM accumulator persisting across the K grid axis;
    bias + ReLU + output-dtype cast (bf16 for activations) in the finalize step.
    """
    @pl.when(pl.program_id(2) == 0)
    def _():
        acc_ref[...] = jnp.zeros_like(acc_ref)

    acc_ref[...] += jnp.dot(
        x_ref[...], w_ref[...], preferred_element_type=jnp.float32
    )

    @pl.when(pl.program_id(2) == pl.num_programs(2) - 1)
    def _():
        acc = acc_ref[...] + b_ref[...]
        if relu:
            acc = jnp.maximum(acc, 0.0)
        o_ref[...] = acc.astype(o_ref.dtype)


class PaddedLinear:
    """Linear layer: bf16 weights (padded ONCE at init, only if needed), f32 bias.

    Small (<128) K/N dims use full-array-dim blocks so no activation padding /
    output slicing happens per call; large dims are tiled at 128-multiples.
    """

    def __init__(self, w, b, relu=False, out_dtype=jnp.float32):
        K, N = int(w.shape[0]), int(w.shape[1])
        self.K, self.N = K, N
        self.relu = relu
        self.out_dtype = out_dtype

        Kp = K if K <= 128 else _round_up(K, 128)
        Np = N if N <= 128 else _round_up(N, 128)
        if Kp <= 512:
            tk = Kp
        else:
            tk = max(c for c in (512, 384, 256, 128) if Kp % c == 0)
        if Np <= 256:
            tn = Np
        else:
            tn = max(c for c in (256, 128) if Np % c == 0)
        self.Kp, self.Np, self.tk, self.tn = Kp, Np, tk, tn

        wb = w.astype(jnp.bfloat16)
        if (Kp, Np) != (K, N):
            wb = jnp.zeros((Kp, Np), jnp.bfloat16).at[:K, :N].set(wb)
        self.wp = wb
        bf = b.astype(jnp.float32)
        if Np != N:
            self.bp = jnp.zeros((1, Np), jnp.float32).at[0, :N].set(bf)
        else:
            self.bp = bf.reshape(1, N)

    def __call__(self, x):
        M, K = x.shape
        Kp, Np, tk, tn = self.Kp, self.Np, self.tk, self.tn

        # M tiling: cap at TM_MAX (256 on v6e/v7x, 128 on v5e), multiples of 16
        # (bf16 packs 16 rows per sublane group).  On v7x, real-sized M gives
        # >=2 "parallel" M blocks so both TensorCores get work.
        if M >= TM_MAX and M % TM_MAX == 0:
            tm, Mp = TM_MAX, M
        elif M > TM_MAX:
            tm, Mp = TM_MAX, _round_up(M, TM_MAX)
        else:
            Mp = _round_up(M, 16)
            tm = Mp

        xb = x if x.dtype == jnp.bfloat16 else x.astype(jnp.bfloat16)
        if (Mp, Kp) != (M, K):
            xb = jnp.zeros((Mp, Kp), jnp.bfloat16).at[:M, :K].set(xb)

        grid = (Mp // tm, Np // tn, Kp // tk)
        out = pl.pallas_call(
            functools.partial(_matmul_bias_kernel, relu=self.relu),
            out_shape=jax.ShapeDtypeStruct((Mp, Np), self.out_dtype),
            grid_spec=pltpu.PrefetchScalarGridSpec(
                num_scalar_prefetch=0,
                grid=grid,
                in_specs=[
                    pl.BlockSpec((tm, tk), lambda i, j, k: (i, k)),
                    pl.BlockSpec((tk, tn), lambda i, j, k: (k, j)),
                    pl.BlockSpec((1, tn), lambda i, j, k: (0, j)),
                ],
                out_specs=pl.BlockSpec((tm, tn), lambda i, j, k: (i, j)),
                scratch_shapes=[pltpu.VMEM((tm, tn), jnp.float32)],
            ),
            compiler_params=pltpu.CompilerParams(
                dimension_semantics=("parallel", "parallel", "arbitrary"),
                vmem_limit_bytes=VMEM_LIMIT_BYTES,
            ),
        )(xb, self.wp, self.bp)

        if Mp != M:
            out = out[:M]
        if Np != self.N:
            out = out[:, : self.N]
        return out


# ----------------------------------------------------------------------------- fused 3x3 stride-1 conv (no HBM im2col)
def _conv3x3_s1_kernel(x_ref, w_ref, b_ref, o_ref, *, relu):
    """3x3 / stride 1 / pad 1 conv on one image (channel-tile of the output).

    x_ref : (H+2, W+2, C)  spatially padded input slab (bf16)
    w_ref : (9, C, tn)     tap-major weights (bf16)
    b_ref : (1, tn)        f32 bias
    o_ref : (H, W, tn)     output (bf16)
    The 9 taps are folded into in-kernel static-sliced matmuls (f32 accum in
    vregs) — no im2col tensor ever touches HBM.
    """
    oh_n, ow_n, tn = o_ref.shape
    bias = b_ref[...]  # (1, tn)
    for oh in range(oh_n):
        acc = jnp.zeros((ow_n, tn), jnp.float32)
        for t in range(9):
            ti, tj = divmod(t, 3)
            patch = x_ref[oh + ti, tj:tj + ow_n, :]          # (ow_n, C) bf16
            acc = acc + jnp.dot(
                patch, w_ref[t], preferred_element_type=jnp.float32
            )
        acc = acc + bias
        if relu:
            acc = jnp.maximum(acc, 0.0)
        o_ref[oh] = acc.astype(o_ref.dtype)


def pallas_conv3x3_s1(x_nhwc, w9, b, relu=True, out_dtype=jnp.bfloat16):
    """x_nhwc:(N,H,W,C) bf16; w9:(9,C,OCp) bf16; b:(1,OCp) f32 -> (N,H,W,OCp)."""
    N, H, W, C = x_nhwc.shape
    _, _, OCp = w9.shape
    xp = jnp.pad(x_nhwc, ((0, 0), (1, 1), (1, 1), (0, 0)))   # pad=1 ring (tiny)
    tn = OCp if OCp <= 128 else 128
    grid = (N, OCp // tn)
    return pl.pallas_call(
        functools.partial(_conv3x3_s1_kernel, relu=relu),
        out_shape=jax.ShapeDtypeStruct((N, H, W, OCp), out_dtype),
        grid=grid,
        in_specs=[
            pl.BlockSpec((None, H + 2, W + 2, C), lambda n, j: (n, 0, 0, 0)),
            pl.BlockSpec((9, C, tn), lambda n, j: (0, 0, j)),
            pl.BlockSpec((1, tn), lambda n, j: (0, j)),
        ],
        out_specs=pl.BlockSpec((None, H, W, tn), lambda n, j: (n, 0, 0, j)),
        compiler_params=pltpu.CompilerParams(
            dimension_semantics=("parallel", "parallel"),
            vmem_limit_bytes=VMEM_LIMIT_BYTES,
        ),
    )(xp, w9, b)


# ----------------------------------------------------------------------------- proposal kernel
def _proposal_kernel(anc_ref, loc_ref, sco_ref, box_ref, obj_ref, *, img_h, img_w):
    """loc2bbox decode + clip to image + objectness ranking margin.

    Layout: coordinates on sublanes, anchors on lanes (lane-dense stores).
      anc/loc : (4, R) rows = (x1,y1,x2,y2) / (dx,dy,dw,dh)
      sco     : (2, R) rows = (bg_logit, fg_logit)
      box     : (4, R) decoded, clipped boxes
      obj     : (1, R) fg - bg logit margin (monotonic with softmax fg prob,
                so top-k ordering is identical — no exp/reciprocal needed).
    All math kept in f32 (v5e VPU/EUP have no bf16 path).
    """
    anc = anc_ref[...]
    loc = loc_ref[...]

    x1, y1, x2, y2 = anc[0:1], anc[1:2], anc[2:3], anc[3:4]
    w = x2 - x1
    h = y2 - y1
    cx = x1 + 0.5 * w
    cy = y1 + 0.5 * h

    dx, dy, dw, dh = loc[0:1], loc[1:2], loc[2:3], loc[3:4]
    ncx = dx * w + cx
    ncy = dy * h + cy
    nw = jnp.exp(dw) * w
    nh = jnp.exp(dh) * h

    box_ref[0:1, :] = jnp.clip(ncx - 0.5 * nw, 0.0, img_w)
    box_ref[1:2, :] = jnp.clip(ncy - 0.5 * nh, 0.0, img_h)
    box_ref[2:3, :] = jnp.clip(ncx + 0.5 * nw, 0.0, img_w)
    box_ref[3:4, :] = jnp.clip(ncy + 0.5 * nh, 0.0, img_h)

    obj_ref[...] = sco_ref[1:2, :] - sco_ref[0:1, :]   # fg - bg logit


def pallas_proposals(anchors_t, locs_t, scos_t, img_h, img_w):
    """anchors_t:(4,R), locs_t:(N,4,R), scos_t:(N,2,R) -> boxes:(N,4,R), obj:(N,1,R).

    Anchors are batch-invariant and broadcast across the batch via the
    index_map (no jnp.tile / HBM replication).
    """
    # TODO(synk): fuse this decode into the RPN-head GEMM finalize; skipped
    # because the per-anchor column layout there would force ~45 narrow masked
    # lane stores per tile, and the rpn_out tensor is small anyway.
    N = locs_t.shape[0]
    R = anchors_t.shape[1]
    return pl.pallas_call(
        functools.partial(_proposal_kernel, img_h=float(img_h), img_w=float(img_w)),
        out_shape=(
            jax.ShapeDtypeStruct((N, 4, R), jnp.float32),
            jax.ShapeDtypeStruct((N, 1, R), jnp.float32),
        ),
        grid=(N,),
        in_specs=[
            pl.BlockSpec((4, R), lambda n: (0, 0)),
            pl.BlockSpec((None, 4, R), lambda n: (n, 0, 0)),
            pl.BlockSpec((None, 2, R), lambda n: (n, 0, 0)),
        ],
        out_specs=(
            pl.BlockSpec((None, 4, R), lambda n: (n, 0, 0)),
            pl.BlockSpec((None, 1, R), lambda n: (n, 0, 0)),
        ),
        compiler_params=pltpu.CompilerParams(
            dimension_semantics=("parallel",),
            vmem_limit_bytes=VMEM_LIMIT_BYTES,
        ),
    )(anchors_t, locs_t, scos_t)


# ----------------------------------------------------------------------------- conv-as-matmul glue (stride-16 extractor only)
def im2col(x_nhwc, ksize, stride, pad):
    """([N*OH*OW, ksize*ksize*C], OH, OW), (kh,kw,C) feature order, input dtype.

    Only used for the stride-16 extractor conv: with stride >= ksize the taps
    don't overlap, so im2col traffic is ~k^2/stride^2 (~3.5%) of the input and
    folding the taps into the GEMM would buy nothing.
    """
    if pad > 0:
        x_nhwc = jnp.pad(x_nhwc, ((0, 0), (pad, pad), (pad, pad), (0, 0)))
    N, H, W, C = x_nhwc.shape
    oh = (H - ksize) // stride + 1
    ow = (W - ksize) // stride + 1
    patches = []
    for i in range(ksize):
        for j in range(ksize):
            patches.append(
                x_nhwc[:, i : i + stride * oh : stride, j : j + stride * ow : stride, :]
            )
    cols = jnp.concatenate(patches, axis=-1)
    return cols.reshape(N * oh * ow, ksize * ksize * C), oh, ow


# ----------------------------------------------------------------------------- anchors / roi pool
def generate_anchor_base(base_size=16, ratios=(0.5, 1.0, 2.0), scales=(8, 16, 32)):
    rows = []
    for r in ratios:
        for s in scales:
            h = base_size * s * math.sqrt(r)
            w = base_size * s * math.sqrt(1.0 / r)
            rows.append([-w / 2.0, -h / 2.0, w / 2.0, h / 2.0])  # x1,y1,x2,y2
    return jnp.array(rows, jnp.float32)


def enumerate_shifted_anchors_t(anchor_base, feat_stride, hh, ww):
    """Anchors generated directly in (4, hh*ww*A) lane-dense layout."""
    shift_x = jnp.arange(0, ww * feat_stride, feat_stride, dtype=jnp.float32)
    shift_y = jnp.arange(0, hh * feat_stride, feat_stride, dtype=jnp.float32)
    sx, sy = jnp.meshgrid(shift_x, shift_y)  # (hh, ww)
    shift = jnp.stack([sx.ravel(), sy.ravel(), sx.ravel(), sy.ravel()], axis=1)
    anc = shift[:, None, :] + anchor_base[None, :, :]      # (K, A, 4)
    return anc.transpose(2, 0, 1).reshape(4, -1)            # (4, K*A)


def roi_pool_nearest(feat_nhwc, rois, roi_indices, roi_size, feat_stride):
    """Nearest-neighbour RoI pooling (stand-in for torchvision RoIPool)."""
    # TODO(synk): true RoIPool/RoIAlign (bilinear / max-pool bin) gather has no
    # clean Pallas equivalent at this size; done with JAX advanced indexing.
    # TODO(synk): fuse this gather into the FC GEMM LHS via scalar-prefetched
    # bin indices (PrefetchScalarGridSpec) to avoid materializing `pooled`.
    N, Fh, Fw, C = feat_nhwc.shape
    x1 = rois[:, 0] / feat_stride
    y1 = rois[:, 1] / feat_stride
    x2 = rois[:, 2] / feat_stride
    y2 = rois[:, 3] / feat_stride
    grid = (jnp.arange(roi_size, dtype=jnp.float32) + 0.5) / roi_size
    ys = y1[:, None] + (y2 - y1)[:, None] * grid[None, :]
    xs = x1[:, None] + (x2 - x1)[:, None] * grid[None, :]
    yi = jnp.clip(jnp.floor(ys).astype(jnp.int32), 0, Fh - 1)
    xi = jnp.clip(jnp.floor(xs).astype(jnp.int32), 0, Fw - 1)
    b = roi_indices[:, None, None]
    return feat_nhwc[b, yi[:, :, None], xi[:, None, :], :]  # (R, rs, rs, C)


# ----------------------------------------------------------------------------- model
class FasterRCNNPallas:
    def __init__(
        self,
        num_classes,
        feat_stride=16,
        anchor_scales=(8, 16, 32),
        ratios=(0.5, 1.0, 2.0),
        in_channels=4,
        feat_channels=32,   # stand-in for 1024
        rpn_mid=32,         # stand-in for 512
        head_hidden=64,     # stand-in for 2048
        roi_size=14,
        n_post_nms=16,
        key=jax.random.PRNGKey(0),
    ):
        self.feat_stride = feat_stride
        self.roi_size = roi_size
        self.n_post_nms = n_post_nms
        self.n_class = num_classes + 1
        self.n_anchor = len(anchor_scales) * len(ratios)
        self.anchor_base = generate_anchor_base(16, ratios, anchor_scales)

        ks = jax.random.split(key, 12)
        init = lambda k, shape: 0.01 * jax.random.normal(k, shape, jnp.float32)

        # extractor: 3x3 stride-16 conv, in_channels -> feat_channels
        # (bf16 activation output, consumed directly by the RPN conv & RoI pool)
        self.ext = PaddedLinear(
            init(ks[0], (3 * 3 * in_channels, feat_channels)),
            jnp.zeros((feat_channels,), jnp.float32),
            relu=True,
            out_dtype=jnp.bfloat16,
        )
        # RPN 3x3 stride-1 conv: tap-major (9, C, OC) bf16 weights for the
        # fused Pallas conv kernel (no HBM im2col).
        self.rpn1_w = init(ks[1], (9, feat_channels, rpn_mid)).astype(jnp.bfloat16)
        self.rpn1_b = jnp.zeros((1, rpn_mid), jnp.float32)
        # fused rpn 1x1 heads: columns [score(2A) | loc(4A)]
        w_score = init(ks[2], (rpn_mid, self.n_anchor * 2))
        w_loc = init(ks[3], (rpn_mid, self.n_anchor * 4))
        self.rpn_head = PaddedLinear(
            jnp.concatenate([w_score, w_loc], axis=1),
            jnp.zeros((self.n_anchor * 6,), jnp.float32),
            relu=False,
            out_dtype=jnp.float32,
        )
        # roi head FC (bf16 activation output feeds the fused cls head)
        self.fc = PaddedLinear(
            init(ks[4], (roi_size * roi_size * feat_channels, head_hidden)),
            jnp.zeros((head_hidden,), jnp.float32),
            relu=True,
            out_dtype=jnp.bfloat16,
        )
        # fused roi heads: columns [cls_loc(n_class*4) | cls_score(n_class)]
        w_cls_loc = init(ks[5], (head_hidden, self.n_class * 4))
        w_cls_score = init(ks[6], (head_hidden, self.n_class))
        self.cls_head = PaddedLinear(
            jnp.concatenate([w_cls_loc, w_cls_score], axis=1),
            jnp.zeros((self.n_class * 5,), jnp.float32),
            relu=False,
            out_dtype=jnp.float32,
        )

    def __call__(self, x, scale=1.0):
        # x: NCHW (PyTorch convention) -> NHWC bf16 for the kernel pipeline.
        N, C, H, W = x.shape
        x_nhwc = jnp.transpose(x, (0, 2, 3, 1)).astype(jnp.bfloat16)

        # ------------------------------------------------ extractor (tiled Pallas GEMM)
        cols, fh, fw = im2col(x_nhwc, ksize=3, stride=self.feat_stride, pad=0)
        feat = self.ext(cols).reshape(N, fh, fw, -1)   # base_feature, NHWC bf16

        # ------------------------------------------------ RPN
        # 3x3 stride-1 conv with taps folded inside the kernel (no HBM im2col)
        mid = pallas_conv3x3_s1(feat, self.rpn1_w, self.rpn1_b, relu=True)  # bf16

        A = self.n_anchor
        rpn_out = self.rpn_head(mid.reshape(N * fh * fw, -1))   # (N*fh*fw, 6A) f32
        R1 = fh * fw * A
        scos_t = (
            rpn_out[:, : 2 * A].reshape(N, fh * fw, A, 2)
            .transpose(0, 3, 1, 2).reshape(N, 2, R1)
        )
        locs_t = (
            rpn_out[:, 2 * A :].reshape(N, fh * fw, A, 4)
            .transpose(0, 3, 1, 2).reshape(N, 4, R1)
        )
        anchors_t = enumerate_shifted_anchors_t(
            self.anchor_base, self.feat_stride, fh, fw
        )  # (4, R1), shared across the batch

        # decode + clip + objectness margin (Pallas elementwise kernel, lane-dense)
        boxes_t, obj = pallas_proposals(anchors_t, locs_t, scos_t, img_h=H, img_w=W)
        boxes = boxes_t.transpose(0, 2, 1)          # (N, R1, 4)
        obj = obj.reshape(N, R1)                    # fg - bg logit margin

        # proposal selection
        # TODO(synk): torchvision NMS + min_size filtering of ProposalCreator has
        # no clean Pallas equivalent; proposals selected by top-k objectness only.
        k = min(self.n_post_nms, R1)
        _, top_idx = jax.lax.top_k(obj, k)                               # (N, k)
        rois = jnp.take_along_axis(boxes, top_idx[:, :, None], axis=1)   # (N, k, 4)
        rois = rois.reshape(N * k, 4)
        roi_indices = jnp.repeat(jnp.arange(N, dtype=jnp.int32), k)      # (N*k,)

        # ------------------------------------------------ RoI head (tiled Pallas GEMMs)
        pooled = roi_pool_nearest(
            feat, rois, roi_indices, self.roi_size, self.feat_stride
        )  # (R, rs, rs, Cf) bf16 — feat already bf16, no recast
        pooled_flat = pooled.reshape(pooled.shape[0], -1)
        fc7 = self.fc(pooled_flat)                      # bf16 activation
        head_out = self.cls_head(fc7)                   # fused [cls_loc | score] f32
        roi_cls_locs = head_out[:, : self.n_class * 4]
        roi_scores = head_out[:, self.n_class * 4 :]

        return roi_cls_locs, roi_scores, rois, roi_indices


# ----------------------------------------------------------------------------- main
if __name__ == "__main__":
    key = jax.random.PRNGKey(0)
    k_x, k_w = jax.random.split(key)

    # small, module-consistent shapes: batch=2, channels=4, spatial=32
    # (feat_stride=16 -> 2x2 feature map)
    x = jax.random.normal(k_x, (2, 4, 32, 32), jnp.float32)

    model = FasterRCNNPallas(num_classes=3, key=k_w)
    roi_cls_locs, roi_scores, rois, roi_indices = model(x, scale=1.0)

    jax.block_until_ready((roi_cls_locs, roi_scores, rois, roi_indices))

    assert roi_cls_locs.shape == (32, 16)   # (total_rois, (num_classes+1)*4)
    assert roi_scores.shape == (32, 4)      # (total_rois, num_classes+1)
    assert rois.shape == (32, 4)
    assert roi_indices.shape == (32,)
    print("KERNEL_OK")
</pallas_src>

<mosaic_0001>
module attributes {stable_mosaic.version = 11 : i64} {
  func.func @_matmul_bias_kernel(%arg0: i32, %arg1: i32, %arg2: i32, %arg3: memref<16x36xbf16, #tpu.memory_space<vmem>>, %arg4: memref<36x32xbf16, #tpu.memory_space<vmem>>, %arg5: memref<1x32xf32, #tpu.memory_space<vmem>>, %arg6: memref<16x32xbf16, #tpu.memory_space<vmem>>, %arg7: memref<16x32xf32, #tpu.memory_space<vmem>>) attributes {dimension_semantics = [#tpu.dimension_semantics<parallel>, #tpu.dimension_semantics<parallel>, #tpu.dimension_semantics<arbitrary>], iteration_bounds = array<i64: 1, 1, 1>, scalar_prefetch = 0 : i64, scratch_operands = 1 : i64, tpu.core_type = #tpu.core_type<tc>, window_params = [{transform_indices = @transform_0, window_bounds = array<i64: 16, 36>}, {transform_indices = @transform_1, window_bounds = array<i64: 36, 32>}, {transform_indices = @transform_2, window_bounds = array<i64: 1, 32>}, {transform_indices = @transform_3, window_bounds = array<i64: 16, 32>}]} {
    %c0_i32 = arith.constant 0 : i32
    %0 = arith.cmpi eq, %arg2, %c0_i32 : i32
    %1 = arith.extui %0 : i1 to i32
    %c0_i32_0 = arith.constant 0 : i32
    %2 = arith.cmpi ne, %1, %c0_i32_0 : i32
    scf.if %2 {
      %cst_10 = arith.constant 0.000000e+00 : f32
      %12 = vector.broadcast %cst_10 : f32 to vector<16x32xf32>
      %c0_11 = arith.constant 0 : index
      %c0_12 = arith.constant 0 : index
      %13 = vector.load %arg7[%c0_11, %c0_12] : memref<16x32xf32, #tpu.memory_space<vmem>>, vector<16x32xf32>
      tpu.vector_store %arg7[%c0_11, %c0_12], %12 {strides = array<i32>} : memref<16x32xf32, #tpu.memory_space<vmem>>, vector<16x32xf32>,
    } else {
    }
    %c0 = arith.constant 0 : index
    %c0_1 = arith.constant 0 : index
    %3 = vector.load %arg7[%c0, %c0_1] : memref<16x32xf32, #tpu.memory_space<vmem>>, vector<16x32xf32>
    %c0_2 = arith.constant 0 : index
    %c0_3 = arith.constant 0 : index
    %4 = vector.load %arg3[%c0_2, %c0_3] : memref<16x36xbf16, #tpu.memory_space<vmem>>, vector<16x36xbf16>
    %c0_4 = arith.constant 0 : index
    %c0_5 = arith.constant 0 : index
    %5 = vector.load %arg4[%c0_4, %c0_5] : memref<36x32xbf16, #tpu.memory_space<vmem>>, vector<36x32xbf16>
    %cst = arith.constant dense<0.000000e+00> : vector<16x32xf32>
    %6 = tpu.matmul %4, %5, %cst {dimension_numbers = #tpu.dot_dimension_numbers<[1], [0], [0], [1], [0, 0, 1, 1], [], []>} : vector<16x36xbf16>, vector<36x32xbf16>, vector<16x32xf32> -> vector<16x32xf32>
    %7 = arith.addf %3, %6 : vector<16x32xf32>
    %c0_6 = arith.constant 0 : index
    %c0_7 = arith.constant 0 : index
    %8 = vector.load %arg7[%c0_6, %c0_7] : memref<16x32xf32, #tpu.memory_space<vmem>>, vector<16x32xf32>
    tpu.vector_store %arg7[%c0_6, %c0_7], %7 {strides = array<i32>} : memref<16x32xf32, #tpu.memory_space<vmem>>, vector<16x32xf32>,
    %c0_i32_8 = arith.constant 0 : i32
    %9 = arith.cmpi eq, %arg2, %c0_i32_8 : i32
    %10 = arith.extui %9 : i1 to i32
    %c0_i32_9 = arith.constant 0 : i32
    %11 = arith.cmpi ne, %10, %c0_i32_9 : i32
    scf.if %11 {
      %c0_10 = arith.constant 0 : index
      %c0_11 = arith.constant 0 : index
      %12 = vector.load %arg7[%c0_10, %c0_11] : memref<16x32xf32, #tpu.memory_space<vmem>>, vector<16x32xf32>
      %c0_12 = arith.constant 0 : index
      %c0_13 = arith.constant 0 : index
      %13 = vector.load %arg5[%c0_12, %c0_13] : memref<1x32xf32, #tpu.memory_space<vmem>>, vector<1x32xf32>
      %14 = vector.broadcast %13 : vector<1x32xf32> to vector<16x32xf32>
      %15 = arith.addf %12, %14 : vector<16x32xf32>
      %cst_14 = arith.constant 0.000000e+00 : f32
      %16 = vector.broadcast %cst_14 : f32 to vector<16x32xf32>
      %17 = arith.maximumf %15, %16 : vector<16x32xf32>
      %18 = arith.truncf %17 : vector<16x32xf32> to vector<16x32xbf16>
      %c0_15 = arith.constant 0 : index
      %c0_16 = arith.constant 0 : index
      %19 = vector.load %arg6[%c0_15, %c0_16] : memref<16x32xbf16, #tpu.memory_space<vmem>>, vector<16x32xbf16>
      tpu.vector_store %arg6[%c0_15, %c0_16], %18 {strides = array<i32>} : memref<16x32xbf16, #tpu.memory_space<vmem>>, vector<16x32xbf16>,
    } else {
    }
    return
  }
  func.func @transform_0(%arg0: i32, %arg1: i32, %arg2: i32) -> (i32, i32) {
    %c0_i32 = arith.constant 0 : i32
    return %arg0, %arg2 : i32, i32
  }
  func.func @transform_1(%arg0: i32, %arg1: i32, %arg2: i32) -> (i32, i32) {
    %c0_i32 = arith.constant 0 : i32
    return %arg2, %arg1 : i32, i32
  }
  func.func @transform_2(%arg0: i32, %arg1: i32, %arg2: i32) -> (i32, i32) {
    %c0_i32 = arith.constant 0 : i32
    %c0_i32_0 = arith.constant 0 : i32
    return %c0_i32, %arg1 : i32, i32
  }
  func.func @transform_3(%arg0: i32, %arg1: i32, %arg2: i32) -> (i32, i32) {
    %c0_i32 = arith.constant 0 : i32
    return %arg0, %arg1 : i32, i32
  }
}

</mosaic_0001>

<llo_original>
// kernel: tpu_custom_call.1
$region0: #{tpu_custom_call.1}
  #allocation0 [shape = 'u32[]', space=smem, size = 0x4, offset = 0x4, fixed_abs, tag = 'smem constant byte address 0x4 - core index']
  #allocation1 [shape = 'u32[144,128]{1,0:T(1,128)}', space=vmem, size = 0x12000, scoped, tag = 'internal scratch']
  #allocation2 [shape = 'f32[16,32]{1,0:T(8,128)}', space=vmem, size = 0x2000, scoped, tag = 'scratch operand']
  %s0 = inlined_call_operand.vmem [shape: bf16[16,36], index: 0, kind: input, shape index: {}]
  %s1 = inlined_call_operand.vmem [shape: bf16[36,32], index: 1, kind: input, shape index: {}]
  %s2 = inlined_call_operand.vmem [shape: f32[1,32], index: 2, kind: input, shape index: {}]
  %s3 = inlined_call_operand.hbm [shape: bf16[16,32], index: 3, kind: output, shape index: {}]
  %s4 = sld [smem:[#allocation0]]
  $region30: #{tpu_custom_call.1} parent=0
    _
  %s6 = ssub.s32 1, %s4
  %s7 = scalar_select 0, %s6, %s4
  $region1: #{tpu_custom_call.1} parent=0
    #allocation3 [shape = 'u8[4096]{0}', space=vmem, size = 0x1000, scoped, tag = 'output window, operand 0, single buffered']
    #allocation4 [shape = 's32[1]{0}', space=sflag, size = 0x4, scoped, tag = 'scoped memory for tpu_custom_call.1']
    %8 = vsyncpa [#allocation4], 0
    // Predicated region
    $region2: #{tpu_custom_call.1} parent=1 // pred_check
      _
    $region3: #{tpu_custom_call.1} parent=1 // pred_check_branch
      %10 = sbr.rel (0) target = $region5
    $region4: #{tpu_custom_call.1} parent=1 // pred_region
      _
    $region5: #{tpu_custom_call.1} parent=1 // pred_fallthru
      _
    // Predicated region
    $region6: #{tpu_custom_call.1} parent=1 // pred_check
      _
    $region7: #{tpu_custom_call.1} parent=1 // pred_check_branch
      %12 = sbr.rel (0) target = $region9
    $region8: #{tpu_custom_call.1} parent=1 // pred_region
      _
    $region9: #{tpu_custom_call.1} parent=1 // pred_fallthru
      _
    // Predicated region
    $region10: #{tpu_custom_call.1} parent=1 // pred_check
      _
    $region11: #{tpu_custom_call.1} parent=1 // pred_check_branch
      %14 = sbr.rel (0) target = $region13
    $region12: #{tpu_custom_call.1} parent=1 // pred_region
      _
    $region13: #{tpu_custom_call.1} parent=1 // pred_fallthru
      _
    %p16 = scmp.eq.s32.totalorder 0, 0
    // Predicated region
    $region14: #{tpu_custom_call.1} parent=1 // pred_check
      %p17 = pneg %p16
    $region15: #{tpu_custom_call.1} parent=1 // pred_check_branch
      %19 = sbr.rel (%p17) target = $region17
    $region16: #{tpu_custom_call.1} parent=1 // pred_region
      %vm20 = vcmask 261120
      %21 = vst.msk [vmem:[#allocation2] sm:$0xff] %vm20, 0.0
      %22 = vst.msk [vmem:[#allocation2 + $0x8] sm:$0xff] %vm20, 0.0
    $region17: #{tpu_custom_call.1} parent=1 // pred_fallthru
      _
    %v23 = vld [vmem:[#allocation2] sm:$0xff]
    %v24 = vld [vmem:[#allocation2 + $0x8] sm:$0xff]
    %v25 = vld [vmem:[%s0] sm:$0xf]
    %v26 = vld [vmem:[%s0 + $0x4] sm:$0xf]
    %v27 = vld [vmem:[%s1] sm:$0xf]
    %v28 = vld [vmem:[%s1 + $0x4] sm:$0xf]
    %v29 = vld [vmem:[%s1 + $0x8] sm:$0xf]
    %v30 = vld [vmem:[%s1 + $0xc] sm:$0xf]
    %v31 = vld [vmem:[%s1 + $0x10] sm:$0x3]
    %v34 = vunpack.c.l.b16 %v25
    %v35 = vunpack.c.l.b16 %v26
    %v36 = vpack.c.b16 %v35, %v34
    %v42 = vunpack.c.l.b16 %v27
    %v43 = vunpack.c.l.b16 %v28
    %v44 = vunpack.c.l.b16 %v29
    %v45 = vunpack.c.l.b16 %v30
    %v46 = vunpack.c.l.b16 %v31
    %v47 = vpack.c.b16 %v43, %v42
    %v48 = vpack.c.b16 %v45, %v44
    %v49 = vpack.c.b16 %v46, %v46
    %vm52 = vcmask 293888
    %v54 = vsel %vm52, %v36, 0
    %vm56 = vcmask 1041408
    %v58 = vsel %vm56, %v49, 0
    %60 = vmatprep.subr.bf16.mxu0 0
    %61 = vmatpush1.bf16.msra.mxu0 %v47
    %62 = vmatprep.subr.bf16.mxu0 0
    %63 = vmatpush1.bf16.msra.mxu0 %v48
    %64 = vmatprep.subr.bf16.mxu0 0
    %65 = vmatpush1.bf16.msra.mxu0 %v58
    %66 = vmatprep.subr.bf16.mxu0 0
    %67 = vmatpush1.bf16.msra.mxu0 0
    %68 = vmatprep.subr.bf16.mxu0 0
    %69 = vmatpush1.bf16.msra.mxu0 0
    %70 = vmatprep.subr.bf16.mxu0 0
    %71 = vmatpush1.bf16.msra.mxu0 0
    %72 = vmatprep.subr.bf16.mxu0 0
    %73 = vmatpush1.bf16.msra.mxu0 0
    %74 = vmatprep.subr.bf16.mxu0 0
    %75 = vmatpush1.bf16.msra.mxu0 0
    %76 = vmatprep.subr.bf16.mxu0 0
    %77 = vmatpush1.bf16.msra.mxu0 0
    %78 = vmatprep.subr.bf16.mxu0 0
    %79 = vmatpush1.bf16.msra.mxu0 0
    %80 = vmatprep.subr.bf16.mxu0 0
    %81 = vmatpush1.bf16.msra.mxu0 0
    %82 = vmatprep.subr.bf16.mxu0 0
    %83 = vmatpush1.bf16.msra.mxu0 0
    %84 = vmatprep.subr.bf16.mxu0 0
    %85 = vmatpush1.bf16.msra.mxu0 0
    %86 = vmatprep.subr.bf16.mxu0 0
    %87 = vmatpush1.bf16.msra.mxu0 0
    %88 = vmatprep.subr.bf16.mxu0 0
    %89 = vmatpush1.bf16.msra.mxu0 0
    %90 = vmatprep.subr.bf16.mxu0 0
    %91 = vmatpush1.bf16.msra.mxu0 0
    %92 = vmatprep.mubr.bf16.mxu0 0
    %93 = vmatmul.mubr.bf16.gmra.mrb[0].mxu0 %v54
    %v94 = vpop.f32.mrb[0].mxu0
    %v95 = vadd.f32 0.0, %v94
    %v96 = vpop.f32.mrb[0].mxu0
    %v97 = vpop.f32.mrb[0].mxu0
    %v98 = vadd.f32 0.0, %v97
    %v99 = vpop.f32.mrb[0].mxu0
    %100 = vdwg.mxu0
    %v101 = vadd.f32 %v23, %v95
    %v102 = vadd.f32 %v24, %v98
    %vm103 = vcmask 261120
    %104 = vst.msk [vmem:[#allocation2] sm:$0xff] %vm103, %v101
    %105 = vst.msk [vmem:[#allocation2 + $0x8] sm:$0xff] %vm103, %v102
    // Predicated region
    $region18: #{tpu_custom_call.1} parent=1 // pred_check
      %p106 = pneg %p16
    $region19: #{tpu_custom_call.1} parent=1 // pred_check_branch
      %108 = sbr.rel (%p106) target = $region21
    $region20: #{tpu_custom_call.1} parent=1 // pred_region
      %v109 = vld [vmem:[#allocation2] sm:$0xff]
      %v110 = vld [vmem:[#allocation2 + $0x8] sm:$0xff]
      %v111 = vld [vmem:[%s2] sm:$0x1]
      %v113 = vlaneseq
      %v114 = vshrl.u32 %v113, 7
      %v115 = vsub.s32 0, %v114
      %v116 = vrot.slane %v111, %v115
      %v118 = vadd.f32 %v109, %v116
      %v119 = vadd.f32 %v110, %v116
      %v120 = vmax.f32 %v118, 0.0
      %v121 = vmax.f32 %v119, 0.0
      %v122 = vpack.c.bf16 %v121, %v120
      %v124 = vunpack.c.l.b16 %v122
      %v125 = vunpack.c.h.b16 %v122
      %v126 = vpack.c.b16 %v124, %v124
      %v127 = vpack.c.b16 %v125, %v125
      %vm130 = vcmask 257024
      %131 = vst.msk [vmem:[#allocation3] sm:$0xf] %vm130, %v126
      %132 = vst.msk [vmem:[#allocation3 + $0x4] sm:$0xf] %vm130, %v127
    $region21: #{tpu_custom_call.1} parent=1 // pred_fallthru
      _
    // Predicated region
    $region22: #{tpu_custom_call.1} parent=1 // pred_check
      _
    $region23: #{tpu_custom_call.1} parent=1 // pred_check_branch
      %134 = sbr.rel (0) target = $region25
    $region24: #{tpu_custom_call.1} parent=1 // pred_region
      %s136 = ssub.s32 128, 128
      %137 = vsyncadd [#allocation4], %s136
      %s138 = sshll.u32 [#allocation3], 4
      %s139 = int_to_ptr.vmem [resolvable:$true] %s138
      %144 = dma.vmem_to_hbm [thread:$0]  %s139, 128, %s3, [#allocation4], 64, 64, 4
    $region25: #{tpu_custom_call.1} parent=1 // pred_fallthru
      _
    // Predicated region
    $region26: #{tpu_custom_call.1} parent=1 // pred_check
      _
    $region27: #{tpu_custom_call.1} parent=1 // pred_check_branch
      %146 = sbr.rel (0) target = $region29
    $region28: #{tpu_custom_call.1} parent=1 // pred_region
      %147 = dma.done [#allocation4], 128
    $region29: #{tpu_custom_call.1} parent=1 // pred_fallthru
      _
    %148 = vsyncpa [#allocation4], 1

</llo_original>
